<compile_context>
chip_gen: v7x
topology: tpu7x:2x2x1
jax: 0.10.0
libtpu: 0.0.40
codegen_flags: <defaults>
</compile_context>

<pallas_src>
import jax
import jax.numpy as jnp
from jax.experimental import pallas as pl
from jax.experimental.pallas import tpu as pltpu

LANE = 128


def _round_up(x, m):
    return ((x + m - 1) // m) * m


# ---------------------------------------------------------------------------
# Small-shape path: single block, VPU multiply-add (no MXU), lane-dense output.
# ---------------------------------------------------------------------------
def _linear_small_kernel(x_ref, w_ref, b_ref, o_ref):
    # x: (B, K), w: (K, Np), b: (1, Np) -> o: (B, Np)   (Np = OUT padded to 128)
    x = x_ref[...].astype(jnp.float32)
    w = w_ref[...].astype(jnp.float32)
    b = b_ref[...].astype(jnp.float32)
    B, K = x.shape
    N = w.shape[1]
    # Tiny contraction: unrolled broadcasted multiply-add on the VPU.  Avoids
    # MXU push/pop latency on a heavily (8,128)-padded 4x5x3 matmul.
    acc = jnp.zeros((B, N), jnp.float32)
    for k in range(K):
        acc = acc + x[:, k:k + 1] * w[k:k + 1, :]
    o_ref[...] = (acc + b).astype(o_ref.dtype)


def _linear_small(x, w_pad, b_pad, out_dtype):
    B, K = x.shape
    Np = w_pad.shape[1]
    nbytes = (x.size * x.dtype.itemsize + w_pad.size * w_pad.dtype.itemsize
              + b_pad.size * b_pad.dtype.itemsize
              + B * Np * jnp.dtype(out_dtype).itemsize)
    cost = pl.CostEstimate(flops=2 * B * K * Np, transcendentals=0,
                           bytes_accessed=nbytes)
    return pl.pallas_call(
        _linear_small_kernel,
        out_shape=jax.ShapeDtypeStruct((B, Np), out_dtype),
        in_specs=[
            pl.BlockSpec((B, K), lambda: (0, 0), memory_space=pltpu.VMEM),
            pl.BlockSpec((K, Np), lambda: (0, 0), memory_space=pltpu.VMEM),
            pl.BlockSpec((1, Np), lambda: (0, 0), memory_space=pltpu.VMEM),
        ],
        out_specs=pl.BlockSpec((B, Np), lambda: (0, 0), memory_space=pltpu.VMEM),
        cost_estimate=cost,
    )(x, w_pad, b_pad)


# ---------------------------------------------------------------------------
# Large-shape path: tiled MXU matmul with f32 accumulator and fused bias add.
# ---------------------------------------------------------------------------
def _linear_tiled_kernel(x_ref, w_ref, b_ref, o_ref, acc_ref):
    k = pl.program_id(2)

    @pl.when(k == 0)
    def _init():
        acc_ref[...] = jnp.zeros_like(acc_ref)

    acc_ref[...] += jnp.dot(x_ref[...], w_ref[...],
                            preferred_element_type=jnp.float32)

    @pl.when(k == pl.num_programs(2) - 1)
    def _finalize():
        o_ref[...] = (acc_ref[...] + b_ref[...].astype(jnp.float32)
                      ).astype(o_ref.dtype)


def _linear_tiled(x, w_t, b2d, out_dtype, *, tm=256, tn=256, tk=512):
    M, K = x.shape
    N = w_t.shape[1]
    Mp, Kp, Np = _round_up(M, tm), _round_up(K, tk), _round_up(N, tn)
    xp = jnp.pad(x, ((0, Mp - M), (0, Kp - K)))
    wp = jnp.pad(w_t, ((0, Kp - K), (0, Np - N)))
    bp = jnp.pad(b2d, ((0, 0), (0, Np - N)))
    grid = (Mp // tm, Np // tn, Kp // tk)
    nbytes = (xp.size * xp.dtype.itemsize + wp.size * wp.dtype.itemsize
              + bp.size * bp.dtype.itemsize
              + Mp * Np * jnp.dtype(out_dtype).itemsize)
    cost = pl.CostEstimate(flops=2 * Mp * Kp * Np, transcendentals=0,
                           bytes_accessed=nbytes)
    out = pl.pallas_call(
        _linear_tiled_kernel,
        out_shape=jax.ShapeDtypeStruct((Mp, Np), out_dtype),
        grid_spec=pltpu.PrefetchScalarGridSpec(
            num_scalar_prefetch=0,
            grid=grid,
            in_specs=[
                pl.BlockSpec((tm, tk), lambda i, j, k: (i, k)),
                pl.BlockSpec((tk, tn), lambda i, j, k: (k, j)),
                pl.BlockSpec((1, tn), lambda i, j, k: (0, j)),
            ],
            out_specs=pl.BlockSpec((tm, tn), lambda i, j, k: (i, j)),
            scratch_shapes=[pltpu.VMEM((tm, tn), jnp.float32)],
        ),
        compiler_params=pltpu.CompilerParams(
            dimension_semantics=("parallel", "parallel", "arbitrary"),
            vmem_limit_bytes=32 * 1024 * 1024,
        ),
        cost_estimate=cost,
    )(xp, wp, bp)
    return out[:M, :N]


# ---------------------------------------------------------------------------
# Public wrapper: same semantics as MyLinear.forward (x @ w.T + b),
# w in PyTorch layout (OUT, IN), b in (OUT,).
# ---------------------------------------------------------------------------
def my_linear(x, w, b):
    B, K = x.shape
    OUT, K_w = w.shape
    assert K == K_w, "weight / input inner-dim mismatch"
    # Weight-prep transpose (once, in the wrapper): (OUT, IN) -> (IN, OUT) so the
    # kernel contracts LHS-last with RHS-second-to-last and OUT is lane-dense.
    w_t = w.T
    b2d = b.reshape(1, OUT)
    Np = _round_up(OUT, LANE)

    # Tiny problems: single-block VPU path (launch-overhead bound, the floor).
    # Anything bigger: tiled, pipelined MXU path.
    if B <= 512 and K <= 512 and Np <= 512:
        w_pad = jnp.pad(w_t, ((0, 0), (0, Np - OUT)))
        b_pad = jnp.pad(b2d, ((0, 0), (0, Np - OUT)))
        y = _linear_small(x, w_pad, b_pad, x.dtype)
        return y[:, :OUT]
    return _linear_tiled(x, w_t, b2d, x.dtype)


if __name__ == "__main__":
    # Shapes from the module spec: x = torch.rand(4, 5), MyLinear(5, 3) -> (4, 3).
    inp, outp, batch = 5, 3, 4
    key = jax.random.PRNGKey(0)
    kx, kw, kb = jax.random.split(key, 3)

    x = jax.random.uniform(kx, (batch, inp), dtype=jnp.float32)   # torch.rand analog
    w = jax.random.normal(kw, (outp, inp), dtype=jnp.float32)     # torch.randn analog
    b = jax.random.normal(kb, (outp,), dtype=jnp.float32)         # torch.randn analog

    out = my_linear(x, w, b)
    jax.block_until_ready(out)
    ref = x @ w.T + b
    assert out.shape == (batch, outp)
    assert jnp.allclose(out, ref, atol=1e-5, rtol=1e-5)

    # Also exercise the tiled MXU path at a production-like shape (padding,
    # multi-step K accumulation, megacore-shardable grid).
    k2 = jax.random.PRNGKey(1)
    k2x, k2w, k2b = jax.random.split(k2, 3)
    M2, K2, N2 = 512, 1037, 384
    x2 = jax.random.normal(k2x, (M2, K2), dtype=jnp.float32)
    w2 = jax.random.normal(k2w, (N2, K2), dtype=jnp.float32)
    b2 = jax.random.normal(k2b, (N2,), dtype=jnp.float32)
    out2 = my_linear(x2, w2, b2)
    jax.block_until_ready(out2)
    ref2 = jnp.dot(x2, w2.T, precision=jax.lax.Precision.HIGHEST) + b2
    assert out2.shape == (M2, N2)
    # Loose tolerance: only guards against gross tiling/accumulation bugs,
    # independent of the MXU's internal matmul precision mode.
    assert jnp.allclose(out2, ref2, atol=5e-1, rtol=5e-2)

    print("KERNEL_OK")
</pallas_src>

<mosaic_0001>
module attributes {stable_mosaic.version = 11 : i64} {
  func.func @_linear_small_kernel(%arg0: memref<4x5xf32, #tpu.memory_space<vmem>>, %arg1: memref<5x128xf32, #tpu.memory_space<vmem>>, %arg2: memref<1x128xf32, #tpu.memory_space<vmem>>, %arg3: memref<4x128xf32, #tpu.memory_space<vmem>>) attributes {dimension_semantics = [], scalar_prefetch = 0 : i64, scratch_operands = 0 : i64, tpu.core_type = #tpu.core_type<tc>} {
    %c0 = arith.constant 0 : index
    %c0_0 = arith.constant 0 : index
    %0 = vector.load %arg0[%c0, %c0_0] : memref<4x5xf32, #tpu.memory_space<vmem>>, vector<4x5xf32>
    %c0_1 = arith.constant 0 : index
    %c0_2 = arith.constant 0 : index
    %1 = vector.load %arg1[%c0_1, %c0_2] : memref<5x128xf32, #tpu.memory_space<vmem>>, vector<5x128xf32>
    %c0_3 = arith.constant 0 : index
    %c0_4 = arith.constant 0 : index
    %2 = vector.load %arg2[%c0_3, %c0_4] : memref<1x128xf32, #tpu.memory_space<vmem>>, vector<1x128xf32>
    %cst = arith.constant 0.000000e+00 : f32
    %3 = vector.broadcast %cst : f32 to vector<4x128xf32>
    %4 = vector.extract_strided_slice %0 {offsets = [0, 0], sizes = [4, 1], strides = [1, 1]} : vector<4x5xf32> to vector<4x1xf32>
    %5 = vector.extract_strided_slice %1 {offsets = [0, 0], sizes = [1, 128], strides = [1, 1]} : vector<5x128xf32> to vector<1x128xf32>
    %6 = vector.broadcast %4 : vector<4x1xf32> to vector<4x128xf32>
    %7 = vector.broadcast %5 : vector<1x128xf32> to vector<4x128xf32>
    %8 = arith.mulf %6, %7 : vector<4x128xf32>
    %9 = arith.addf %3, %8 : vector<4x128xf32>
    %10 = vector.extract_strided_slice %0 {offsets = [0, 1], sizes = [4, 1], strides = [1, 1]} : vector<4x5xf32> to vector<4x1xf32>
    %11 = vector.extract_strided_slice %1 {offsets = [1, 0], sizes = [1, 128], strides = [1, 1]} : vector<5x128xf32> to vector<1x128xf32>
    %12 = vector.broadcast %10 : vector<4x1xf32> to vector<4x128xf32>
    %13 = vector.broadcast %11 : vector<1x128xf32> to vector<4x128xf32>
    %14 = arith.mulf %12, %13 : vector<4x128xf32>
    %15 = arith.addf %9, %14 : vector<4x128xf32>
    %16 = vector.extract_strided_slice %0 {offsets = [0, 2], sizes = [4, 1], strides = [1, 1]} : vector<4x5xf32> to vector<4x1xf32>
    %17 = vector.extract_strided_slice %1 {offsets = [2, 0], sizes = [1, 128], strides = [1, 1]} : vector<5x128xf32> to vector<1x128xf32>
    %18 = vector.broadcast %16 : vector<4x1xf32> to vector<4x128xf32>
    %19 = vector.broadcast %17 : vector<1x128xf32> to vector<4x128xf32>
    %20 = arith.mulf %18, %19 : vector<4x128xf32>
    %21 = arith.addf %15, %20 : vector<4x128xf32>
    %22 = vector.extract_strided_slice %0 {offsets = [0, 3], sizes = [4, 1], strides = [1, 1]} : vector<4x5xf32> to vector<4x1xf32>
    %23 = vector.extract_strided_slice %1 {offsets = [3, 0], sizes = [1, 128], strides = [1, 1]} : vector<5x128xf32> to vector<1x128xf32>
    %24 = vector.broadcast %22 : vector<4x1xf32> to vector<4x128xf32>
    %25 = vector.broadcast %23 : vector<1x128xf32> to vector<4x128xf32>
    %26 = arith.mulf %24, %25 : vector<4x128xf32>
    %27 = arith.addf %21, %26 : vector<4x128xf32>
    %28 = vector.extract_strided_slice %0 {offsets = [0, 4], sizes = [4, 1], strides = [1, 1]} : vector<4x5xf32> to vector<4x1xf32>
    %29 = vector.extract_strided_slice %1 {offsets = [4, 0], sizes = [1, 128], strides = [1, 1]} : vector<5x128xf32> to vector<1x128xf32>
    %30 = vector.broadcast %28 : vector<4x1xf32> to vector<4x128xf32>
    %31 = vector.broadcast %29 : vector<1x128xf32> to vector<4x128xf32>
    %32 = arith.mulf %30, %31 : vector<4x128xf32>
    %33 = arith.addf %27, %32 : vector<4x128xf32>
    %34 = vector.broadcast %2 : vector<1x128xf32> to vector<4x128xf32>
    %35 = arith.addf %33, %34 : vector<4x128xf32>
    %c0_5 = arith.constant 0 : index
    %c0_6 = arith.constant 0 : index
    %36 = vector.load %arg3[%c0_5, %c0_6] : memref<4x128xf32, #tpu.memory_space<vmem>>, vector<4x128xf32>
    tpu.vector_store %arg3[%c0_5, %c0_6], %35 {strides = array<i32>} : memref<4x128xf32, #tpu.memory_space<vmem>>, vector<4x128xf32>,
    return
  }
}

</mosaic_0001>

<llo_original>
// kernel: tpu_custom_call.1
$region0: #{tpu_custom_call.1}
  #allocation0 [shape = 'u32[]', space=smem, size = 0x4, offset = 0x4, fixed_abs, tag = 'smem constant byte address 0x4 - core index']
  #allocation1 [shape = 'u32[144,128]{1,0:T(1,128)}', space=vmem, size = 0x12000, scoped, tag = 'internal scratch']
  %s0 = inlined_call_operand.hbm [shape: f32[4,5], index: 0, kind: input, shape index: {}]
  %s1 = inlined_call_operand.hbm [shape: f32[5,128], index: 1, kind: input, shape index: {}]
  %s2 = inlined_call_operand.vmem [shape: f32[1,128], index: 2, kind: input, shape index: {}]
  %s3 = inlined_call_operand.hbm [shape: f32[4,128], index: 3, kind: output, shape index: {}]
  %s4 = sld [smem:[#allocation0]]
  $region30: #{tpu_custom_call.1} parent=0
    _
  %s6 = ssub.s32 1, %s4
  %s7 = scalar_select 0, %s6, %s4
  $region1: #{tpu_custom_call.1} parent=0
    #allocation2 [shape = 'u8[2048]{0}', space=vmem, size = 0x800, scoped, tag = 'input window, operand 0, single buffered']
    #allocation3 [shape = 's32[1]{0}', space=sflag, size = 0x4, scoped, tag = 'scoped memory for tpu_custom_call.1']
    #allocation4 [shape = 's32[1]{0}', space=sflag, size = 0x4, scoped, tag = 'scoped memory for tpu_custom_call.1']
    #allocation5 [shape = 'u8[4096]{0}', space=vmem, size = 0x1000, scoped, tag = 'input window, operand 1, single buffered']
    #allocation6 [shape = 's32[1]{0}', space=sflag, size = 0x4, scoped, tag = 'scoped memory for tpu_custom_call.1']
    #allocation7 [shape = 'u8[2048]{0}', space=vmem, size = 0x800, scoped, tag = 'output window, operand 0, single buffered']
    %8 = vsyncpa [#allocation3], 0
    %9 = vsyncpa [#allocation6], 0
    %10 = vsyncpa [#allocation4], 0
    // Predicated region
    $region2: #{tpu_custom_call.1} parent=1 // pred_check
      _
    $region3: #{tpu_custom_call.1} parent=1 // pred_check_branch
      %12 = sbr.rel (0) target = $region5
    $region4: #{tpu_custom_call.1} parent=1 // pred_region
      %s14 = ssub.s32 64, 64
      %15 = vsyncadd [#allocation3], %s14
      %s17 = sshll.u32 [#allocation2], 4
      %s18 = int_to_ptr.vmem [resolvable:$true] %s17
      %20 = dma.hbm_to_vmem [thread:$0]  %s0, 64, %s18, [#allocation3]
    $region5: #{tpu_custom_call.1} parent=1 // pred_fallthru
      _
    // Predicated region
    $region6: #{tpu_custom_call.1} parent=1 // pred_check
      _
    $region7: #{tpu_custom_call.1} parent=1 // pred_check_branch
      %22 = sbr.rel (0) target = $region9
    $region8: #{tpu_custom_call.1} parent=1 // pred_region
      %s24 = ssub.s32 128, 128
      %25 = vsyncadd [#allocation6], %s24
      %s27 = sshll.u32 [#allocation5], 4
      %s28 = int_to_ptr.vmem [resolvable:$true] %s27
      %30 = dma.hbm_to_vmem [thread:$0]  %s1, 128, %s28, [#allocation6]
    $region9: #{tpu_custom_call.1} parent=1 // pred_fallthru
      _
    // Predicated region
    $region10: #{tpu_custom_call.1} parent=1 // pred_check
      _
    $region11: #{tpu_custom_call.1} parent=1 // pred_check_branch
      %32 = sbr.rel (0) target = $region13
    $region12: #{tpu_custom_call.1} parent=1 // pred_region
      _
    $region13: #{tpu_custom_call.1} parent=1 // pred_fallthru
      _
    // Predicated region
    $region14: #{tpu_custom_call.1} parent=1 // pred_check
      _
    $region15: #{tpu_custom_call.1} parent=1 // pred_check_branch
      %34 = sbr.rel (0) target = $region17
    $region16: #{tpu_custom_call.1} parent=1 // pred_region
      %35 = dma.done [#allocation3], 64
    $region17: #{tpu_custom_call.1} parent=1 // pred_fallthru
      _
    // Predicated region
    $region18: #{tpu_custom_call.1} parent=1 // pred_check
      _
    $region19: #{tpu_custom_call.1} parent=1 // pred_check_branch
      %37 = sbr.rel (0) target = $region21
    $region20: #{tpu_custom_call.1} parent=1 // pred_region
      %38 = dma.done [#allocation6], 128
    $region21: #{tpu_custom_call.1} parent=1 // pred_fallthru
      _
    %v39 = vld [vmem:[#allocation2] sm:$0xf]
    %v40 = vld [vmem:[#allocation5] sm:$0x1f]
    %v41 = vld [vmem:[%s2] sm:$0x1]
    %43 = vset.pattern.permute.xlu0 0
    %44 = vperm.xlu0 %43, %v39
    %v45 = vpop.permute.xlu0 %44
    %v47 = vlaneseq
    %v48 = vshrl.u32 %v47, 7
    %v49 = vsub.s32 0, %v48
    %v50 = vrot.slane %v40, %v49
    %v51 = vmul.f32 %v45, %v50
    %v52 = vadd.f32 %v51, 0.0
    %53 = vset.pattern.permute.xlu0 1
    %54 = vperm.xlu0 %53, %v39
    %v55 = vpop.permute.xlu0 %54
    %v57 = vlaneseq
    %v58 = vshrl.u32 %v57, 7
    %v59 = vsub.s32 1, %v58
    %v60 = vrot.slane %v40, %v59
    %v61 = vmul.f32 %v55, %v60
    %v62 = vadd.f32 %v52, %v61
    %63 = vset.pattern.permute.xlu0 2
    %64 = vperm.xlu0 %63, %v39
    %v65 = vpop.permute.xlu0 %64
    %v67 = vlaneseq
    %v68 = vshrl.u32 %v67, 7
    %v69 = vsub.s32 2, %v68
    %v70 = vrot.slane %v40, %v69
    %v71 = vmul.f32 %v65, %v70
    %v72 = vadd.f32 %v62, %v71
    %73 = vset.pattern.permute.xlu0 3
    %74 = vperm.xlu0 %73, %v39
    %v75 = vpop.permute.xlu0 %74
    %v77 = vlaneseq
    %v78 = vshrl.u32 %v77, 7
    %v79 = vsub.s32 3, %v78
    %v80 = vrot.slane %v40, %v79
    %v81 = vmul.f32 %v75, %v80
    %v82 = vadd.f32 %v72, %v81
    %83 = vset.pattern.permute.xlu0 4
    %84 = vperm.xlu0 %83, %v39
    %v85 = vpop.permute.xlu0 %84
    %v87 = vlaneseq
    %v88 = vshrl.u32 %v87, 7
    %v89 = vsub.s32 4, %v88
    %v90 = vrot.slane %v40, %v89
    %v91 = vmul.f32 %v85, %v90
    %v92 = vadd.f32 %v82, %v91
    %v94 = vlaneseq
    %v95 = vshrl.u32 %v94, 7
    %v96 = vsub.s32 0, %v95
    %v97 = vrot.slane %v41, %v96
    %v99 = vadd.f32 %v92, %v97
    %100 = vst [vmem:[#allocation7] sm:$0xf] %v99
    // Predicated region
    $region22: #{tpu_custom_call.1} parent=1 // pred_check
      _
    $region23: #{tpu_custom_call.1} parent=1 // pred_check_branch
      %102 = sbr.rel (0) target = $region25
    $region24: #{tpu_custom_call.1} parent=1 // pred_region
      %s104 = ssub.s32 64, 64
      %105 = vsyncadd [#allocation4], %s104
      %s107 = sshll.u32 [#allocation7], 4
      %s108 = int_to_ptr.vmem [resolvable:$true] %s107
      %110 = dma.vmem_to_hbm [thread:$0]  %s108, 64, %s3, [#allocation4]
    $region25: #{tpu_custom_call.1} parent=1 // pred_fallthru
      _
    // Predicated region
    $region26: #{tpu_custom_call.1} parent=1 // pred_check
      _
    $region27: #{tpu_custom_call.1} parent=1 // pred_check_branch
      %112 = sbr.rel (0) target = $region29
    $region28: #{tpu_custom_call.1} parent=1 // pred_region
      %113 = dma.done [#allocation4], 64
    $region29: #{tpu_custom_call.1} parent=1 // pred_fallthru
      _
    %114 = vsyncpa [#allocation3], 1
    %115 = vsyncpa [#allocation6], 1
    %116 = vsyncpa [#allocation4], 1

</llo_original>
